<compile_context>
chip_gen: v5e
topology: v5e:2x2
jax: 0.10.0
libtpu: 0.0.40
codegen_flags: <defaults>
</compile_context>

<pallas_src>
import functools

import jax
import jax.numpy as jnp
from jax import lax
from jax.experimental import pallas as pl
from jax.experimental.pallas import tpu as pltpu

LANE = 128
EPS = 1e-12          # matches torch.nn.functional.normalize default eps


def _round_up(x, m):
    return ((x + m - 1) // m) * m


def _cdiv(a, b):
    return (a + b - 1) // b


def _vmem_capacity_bytes():
    """Best-effort VMEM capacity query; falls back to the v7x (64 MiB) floor."""
    try:
        info = pltpu.get_tpu_info()
        for attr in ("vmem_capacity_bytes", "vmem_size_bytes", "vmem_bytes"):
            v = getattr(info, attr, None)
            if isinstance(v, int) and v > 0:
                return v
    except Exception:
        pass
    return 64 * 1024 * 1024


def _normal_vector_loss_kernel(d_ref, out_ref, acc_ref, *, batch):
    i = pl.program_id(1)  # face-tile reduction axis

    @pl.when(i == 0)
    def _():
        acc_ref[...] = jnp.zeros_like(acc_ref)

    eps_sq = jnp.float32(EPS * EPS)

    def comp(role, c):
        # Packed rows: [(role*3 + c)*batch, +batch), faces on lanes.
        return d_ref[pl.ds((role * 3 + c) * batch, batch), :].astype(jnp.float32)

    def normalize3(x, y, z):
        # 1/max(||v||, eps) == rsqrt(max(||v||^2, eps^2)): EUP rsqrt, no f32 divide;
        # zero vectors (padded degenerate faces) still map to exactly 0.
        inv = lax.rsqrt(jnp.maximum(x * x + y * y + z * z, eps_sq))
        return x * inv, y * inv, z * inv

    # --- ground-truth face normal first (g temporaries die early) ------------
    g0x, g0y, g0z = comp(3, 0), comp(3, 1), comp(3, 2)
    g1x, g1y, g1z = comp(4, 0), comp(4, 1), comp(4, 2)
    g2x, g2y, g2z = comp(5, 0), comp(5, 1), comp(5, 2)
    v1x, v1y, v1z = normalize3(g1x - g0x, g1y - g0y, g1z - g0z)
    v2x, v2y, v2z = normalize3(g2x - g0x, g2y - g0y, g2z - g0z)
    nx = v1y * v2z - v1z * v2y
    ny = v1z * v2x - v1x * v2z
    nz = v1x * v2y - v1y * v2x
    nx, ny, nz = normalize3(nx, ny, nz)

    # --- predicted edges: one |cos| term at a time into a running sum --------
    o0x, o0y, o0z = comp(0, 0), comp(0, 1), comp(0, 2)
    o1x, o1y, o1z = comp(1, 0), comp(1, 1), comp(1, 2)
    o2x, o2y, o2z = comp(2, 0), comp(2, 1), comp(2, 2)

    def cos_term(ex, ey, ez):
        ux, uy, uz = normalize3(ex, ey, ez)
        return jnp.abs(ux * nx + uy * ny + uz * nz)

    s = cos_term(o1x - o0x, o1y - o0y, o1z - o0z)
    s = s + cos_term(o2x - o0x, o2y - o0y, o2z - o0z)
    s = s + cos_term(o2x - o1x, o2y - o1y, o2z - o1z)

    # vreg-shaped accumulator: hot loop is pure elementwise VPU/EUP work
    acc_ref[...] += s

    @pl.when(i == pl.num_programs(1) - 1)
    def _():
        out_ref[...] = jnp.full((8, LANE), jnp.sum(acc_ref[...]), jnp.float32)


def normal_vector_loss(coord_out, coord_gt, face):
    """Pallas implementation of NormalVectorLoss.forward."""
    B, V, C = coord_out.shape
    assert C == 3 and coord_gt.shape == coord_out.shape
    face = jnp.asarray(face, jnp.int32)
    F = face.shape[0]

    itemsize = jnp.dtype(coord_out.dtype).itemsize
    R = 18 * B                                    # 6 roles x 3 components x batch rows
    sub_r = _round_up(R, 8)

    # --- tile sizing: faces on lanes, one fused input stream -----------------
    vmem_cap = _vmem_capacity_bytes()
    block_budget = vmem_cap // 32                 # ~2 MiB on v7x, ~4 MiB on v5e/v6e
    tile_f = max(LANE, (block_budget // (sub_r * itemsize)) // LANE * LANE)
    tile_f = min(tile_f, _round_up(F, LANE))      # don't over-tile small meshes

    n_tiles = _cdiv(F, tile_f)
    # TODO(synk): derive the split factor from the real core count; 2 is right for
    # v7x megacore and harmlessly serialized on v5e/v6e. Tiny meshes use 1 split so
    # no grid pass is spent on purely degenerate padding faces.
    num_splits = 2 if n_tiles >= 2 else 1
    tiles_per_split = _cdiv(n_tiles, num_splits)
    F_pad = num_splits * tiles_per_split * tile_f

    # Pad the (tiny) face-index list with degenerate faces (all corners = vertex 0):
    # zero edge vectors -> exactly zero contribution under the eps clamp.
    if F_pad > F:
        face = jnp.concatenate([face, jnp.zeros((F_pad - F, 3), jnp.int32)], axis=0)

    # --- one fused gathered array: (18*B, F_pad), rows = (role, comp, batch) --
    # TODO(synk): the face-index vertex gather still runs in the wrapper (XLA gather);
    # an in-kernel dynamic gather over the vertex axis would remove this HBM round-trip.
    co = jnp.transpose(coord_out, (2, 0, 1)).reshape(3 * B, V)   # rows: comp-major, batch-minor
    cg = jnp.transpose(coord_gt, (2, 0, 1)).reshape(3 * B, V)
    packed = jnp.concatenate(
        [jnp.take(co, face[:, k], axis=1) for k in range(3)]
        + [jnp.take(cg, face[:, k], axis=1) for k in range(3)], axis=0)

    # --- VMEM budget: actual footprint + headroom, kept under v7x's 64 MiB ---
    block_bytes = sub_r * tile_f * itemsize
    acc_bytes = _round_up(B, 8) * tile_f * 4
    footprint = 2 * block_bytes + acc_bytes + 2 * num_splits * 8 * LANE * 4
    vmem_limit = int(min(max(2 * footprint, 16 * 1024 * 1024), 48 * 1024 * 1024))

    in_spec = pl.BlockSpec((R, tile_f), lambda p, i: (0, p * tiles_per_split + i))
    out_spec = pl.BlockSpec((8, LANE), lambda p, i: (p, 0))

    partials = pl.pallas_call(
        functools.partial(_normal_vector_loss_kernel, batch=B),
        out_shape=jax.ShapeDtypeStruct((num_splits * 8, LANE), jnp.float32),
        grid_spec=pltpu.PrefetchScalarGridSpec(
            num_scalar_prefetch=0,
            grid=(num_splits, tiles_per_split),
            in_specs=[in_spec],
            out_specs=out_spec,
            scratch_shapes=[pltpu.VMEM((B, tile_f), jnp.float32)],
        ),
        compiler_params=pltpu.CompilerParams(
            dimension_semantics=("parallel", "arbitrary"),
            vmem_limit_bytes=vmem_limit,
        ),
    )(packed)

    total = jnp.sum(partials[0::8, 0])            # one scalar per split block
    return (total / jnp.float32(3 * B * F)).astype(jnp.float32)


class NormalVectorLoss:
    """Mirrors the PyTorch module: stores the face list, __call__ = forward."""

    def __init__(self, face):
        self.face = jnp.asarray(face, jnp.int32)

    def __call__(self, coord_out, coord_gt):
        return normal_vector_loss(coord_out, coord_gt, self.face)


def normal_vector_loss_ref(coord_out, coord_gt, face):
    face = jnp.asarray(face, jnp.int32)
    co = coord_out.astype(jnp.float32)
    cg = coord_gt.astype(jnp.float32)

    def norm(v):
        n = jnp.linalg.norm(v, axis=2, keepdims=True)
        return v / jnp.maximum(n, EPS)

    v1o = norm(co[:, face[:, 1], :] - co[:, face[:, 0], :])
    v2o = norm(co[:, face[:, 2], :] - co[:, face[:, 0], :])
    v3o = norm(co[:, face[:, 2], :] - co[:, face[:, 1], :])
    v1g = norm(cg[:, face[:, 1], :] - cg[:, face[:, 0], :])
    v2g = norm(cg[:, face[:, 2], :] - cg[:, face[:, 0], :])
    ng = norm(jnp.cross(v1g, v2g, axis=2))
    cos1 = jnp.abs(jnp.sum(v1o * ng, 2, keepdims=True))
    cos2 = jnp.abs(jnp.sum(v2o * ng, 2, keepdims=True))
    cos3 = jnp.abs(jnp.sum(v3o * ng, 2, keepdims=True))
    return jnp.mean(jnp.concatenate((cos1, cos2, cos3), axis=1))


if __name__ == "__main__":
    key = jax.random.PRNGKey(0)
    k1, k2 = jax.random.split(key)

    # Small mesh-like shapes: batch=2, 32 vertices, 100 triangle faces.
    B, V, F = 2, 32, 100
    idx = jnp.arange(F, dtype=jnp.int32)
    face = jnp.stack([idx % V, (idx + 1) % V, (idx + 2) % V], axis=1)

    coord_out = jax.random.normal(k1, (B, V, 3), dtype=jnp.float32)
    coord_gt = jax.random.normal(k2, (B, V, 3), dtype=jnp.float32)

    loss_fn = NormalVectorLoss(face)
    out = jax.block_until_ready(loss_fn(coord_out, coord_gt))
    ref = normal_vector_loss_ref(coord_out, coord_gt, face)

    if jnp.allclose(out, ref, rtol=1e-5, atol=1e-5):
        print("KERNEL_OK")
    else:
        print(f"MISMATCH: kernel={out} ref={ref}")
</pallas_src>

<mosaic_0001>
module attributes {stable_mosaic.version = 11 : i64} {
  func.func @_normal_vector_loss_kernel(%arg0: i32, %arg1: i32, %arg2: memref<36x128xf32, #tpu.memory_space<vmem>>, %arg3: memref<8x128xf32, #tpu.memory_space<vmem>>, %arg4: memref<2x128xf32, #tpu.memory_space<vmem>>) attributes {dimension_semantics = [#tpu.dimension_semantics<parallel>, #tpu.dimension_semantics<arbitrary>], iteration_bounds = array<i64: 1, 1>, scalar_prefetch = 0 : i64, scratch_operands = 1 : i64, tpu.core_type = #tpu.core_type<tc>, window_params = [{transform_indices = @transform_0, window_bounds = array<i64: 36, 128>}, {transform_indices = @transform_1, window_bounds = array<i64: 8, 128>}]} {
    %c0_i32 = arith.constant 0 : i32
    %0 = arith.cmpi eq, %arg1, %c0_i32 : i32
    %1 = arith.extui %0 : i1 to i32
    %c0_i32_0 = arith.constant 0 : i32
    %2 = arith.cmpi ne, %1, %c0_i32_0 : i32
    scf.if %2 {
      %cst_30 = arith.constant 0.000000e+00 : f32
      %137 = vector.broadcast %cst_30 : f32 to vector<2x128xf32>
      %c0_31 = arith.constant 0 : index
      %c0_32 = arith.constant 0 : index
      %138 = vector.load %arg4[%c0_31, %c0_32] : memref<2x128xf32, #tpu.memory_space<vmem>>, vector<2x128xf32>
      tpu.vector_store %arg4[%c0_31, %c0_32], %137 {strides = array<i32>} : memref<2x128xf32, #tpu.memory_space<vmem>>, vector<2x128xf32>,
    } else {
    }
    %c18 = arith.constant 18 : index
    %c0 = arith.constant 0 : index
    %3 = vector.load %arg2[%c18, %c0] : memref<36x128xf32, #tpu.memory_space<vmem>>, vector<2x128xf32>
    %c20 = arith.constant 20 : index
    %c0_1 = arith.constant 0 : index
    %4 = vector.load %arg2[%c20, %c0_1] : memref<36x128xf32, #tpu.memory_space<vmem>>, vector<2x128xf32>
    %c22 = arith.constant 22 : index
    %c0_2 = arith.constant 0 : index
    %5 = vector.load %arg2[%c22, %c0_2] : memref<36x128xf32, #tpu.memory_space<vmem>>, vector<2x128xf32>
    %c24 = arith.constant 24 : index
    %c0_3 = arith.constant 0 : index
    %6 = vector.load %arg2[%c24, %c0_3] : memref<36x128xf32, #tpu.memory_space<vmem>>, vector<2x128xf32>
    %c26 = arith.constant 26 : index
    %c0_4 = arith.constant 0 : index
    %7 = vector.load %arg2[%c26, %c0_4] : memref<36x128xf32, #tpu.memory_space<vmem>>, vector<2x128xf32>
    %c28 = arith.constant 28 : index
    %c0_5 = arith.constant 0 : index
    %8 = vector.load %arg2[%c28, %c0_5] : memref<36x128xf32, #tpu.memory_space<vmem>>, vector<2x128xf32>
    %c30 = arith.constant 30 : index
    %c0_6 = arith.constant 0 : index
    %9 = vector.load %arg2[%c30, %c0_6] : memref<36x128xf32, #tpu.memory_space<vmem>>, vector<2x128xf32>
    %c32 = arith.constant 32 : index
    %c0_7 = arith.constant 0 : index
    %10 = vector.load %arg2[%c32, %c0_7] : memref<36x128xf32, #tpu.memory_space<vmem>>, vector<2x128xf32>
    %c34 = arith.constant 34 : index
    %c0_8 = arith.constant 0 : index
    %11 = vector.load %arg2[%c34, %c0_8] : memref<36x128xf32, #tpu.memory_space<vmem>>, vector<2x128xf32>
    %12 = arith.subf %6, %3 : vector<2x128xf32>
    %13 = arith.subf %7, %4 : vector<2x128xf32>
    %14 = arith.subf %8, %5 : vector<2x128xf32>
    %15 = arith.mulf %12, %12 : vector<2x128xf32>
    %16 = arith.mulf %13, %13 : vector<2x128xf32>
    %17 = arith.addf %15, %16 : vector<2x128xf32>
    %18 = arith.mulf %14, %14 : vector<2x128xf32>
    %19 = arith.addf %17, %18 : vector<2x128xf32>
    %cst = arith.constant 1.000000e-24 : f32
    %20 = vector.broadcast %cst : f32 to vector<2x128xf32>
    %21 = arith.maximumf %19, %20 : vector<2x128xf32>
    %22 = math.rsqrt %21 : vector<2x128xf32>
    %23 = arith.mulf %12, %22 : vector<2x128xf32>
    %24 = arith.mulf %13, %22 : vector<2x128xf32>
    %25 = arith.mulf %14, %22 : vector<2x128xf32>
    %26 = arith.subf %9, %3 : vector<2x128xf32>
    %27 = arith.subf %10, %4 : vector<2x128xf32>
    %28 = arith.subf %11, %5 : vector<2x128xf32>
    %29 = arith.mulf %26, %26 : vector<2x128xf32>
    %30 = arith.mulf %27, %27 : vector<2x128xf32>
    %31 = arith.addf %29, %30 : vector<2x128xf32>
    %32 = arith.mulf %28, %28 : vector<2x128xf32>
    %33 = arith.addf %31, %32 : vector<2x128xf32>
    %cst_9 = arith.constant 1.000000e-24 : f32
    %34 = vector.broadcast %cst_9 : f32 to vector<2x128xf32>
    %35 = arith.maximumf %33, %34 : vector<2x128xf32>
    %36 = math.rsqrt %35 : vector<2x128xf32>
    %37 = arith.mulf %26, %36 : vector<2x128xf32>
    %38 = arith.mulf %27, %36 : vector<2x128xf32>
    %39 = arith.mulf %28, %36 : vector<2x128xf32>
    %40 = arith.mulf %24, %39 : vector<2x128xf32>
    %41 = arith.mulf %25, %38 : vector<2x128xf32>
    %42 = arith.subf %40, %41 : vector<2x128xf32>
    %43 = arith.mulf %25, %37 : vector<2x128xf32>
    %44 = arith.mulf %23, %39 : vector<2x128xf32>
    %45 = arith.subf %43, %44 : vector<2x128xf32>
    %46 = arith.mulf %23, %38 : vector<2x128xf32>
    %47 = arith.mulf %24, %37 : vector<2x128xf32>
    %48 = arith.subf %46, %47 : vector<2x128xf32>
    %49 = arith.mulf %42, %42 : vector<2x128xf32>
    %50 = arith.mulf %45, %45 : vector<2x128xf32>
    %51 = arith.addf %49, %50 : vector<2x128xf32>
    %52 = arith.mulf %48, %48 : vector<2x128xf32>
    %53 = arith.addf %51, %52 : vector<2x128xf32>
    %cst_10 = arith.constant 1.000000e-24 : f32
    %54 = vector.broadcast %cst_10 : f32 to vector<2x128xf32>
    %55 = arith.maximumf %53, %54 : vector<2x128xf32>
    %56 = math.rsqrt %55 : vector<2x128xf32>
    %57 = arith.mulf %42, %56 : vector<2x128xf32>
    %58 = arith.mulf %45, %56 : vector<2x128xf32>
    %59 = arith.mulf %48, %56 : vector<2x128xf32>
    %c0_11 = arith.constant 0 : index
    %c0_12 = arith.constant 0 : index
    %60 = vector.load %arg2[%c0_11, %c0_12] : memref<36x128xf32, #tpu.memory_space<vmem>>, vector<2x128xf32>
    %c2 = arith.constant 2 : index
    %c0_13 = arith.constant 0 : index
    %61 = vector.load %arg2[%c2, %c0_13] : memref<36x128xf32, #tpu.memory_space<vmem>>, vector<2x128xf32>
    %c4 = arith.constant 4 : index
    %c0_14 = arith.constant 0 : index
    %62 = vector.load %arg2[%c4, %c0_14] : memref<36x128xf32, #tpu.memory_space<vmem>>, vector<2x128xf32>
    %c6 = arith.constant 6 : index
    %c0_15 = arith.constant 0 : index
    %63 = vector.load %arg2[%c6, %c0_15] : memref<36x128xf32, #tpu.memory_space<vmem>>, vector<2x128xf32>
    %c8 = arith.constant 8 : index
    %c0_16 = arith.constant 0 : index
    %64 = vector.load %arg2[%c8, %c0_16] : memref<36x128xf32, #tpu.memory_space<vmem>>, vector<2x128xf32>
    %c10 = arith.constant 10 : index
    %c0_17 = arith.constant 0 : index
    %65 = vector.load %arg2[%c10, %c0_17] : memref<36x128xf32, #tpu.memory_space<vmem>>, vector<2x128xf32>
    %c12 = arith.constant 12 : index
    %c0_18 = arith.constant 0 : index
    %66 = vector.load %arg2[%c12, %c0_18] : memref<36x128xf32, #tpu.memory_space<vmem>>, vector<2x128xf32>
    %c14 = arith.constant 14 : index
    %c0_19 = arith.constant 0 : index
    %67 = vector.load %arg2[%c14, %c0_19] : memref<36x128xf32, #tpu.memory_space<vmem>>, vector<2x128xf32>
    %c16 = arith.constant 16 : index
    %c0_20 = arith.constant 0 : index
    %68 = vector.load %arg2[%c16, %c0_20] : memref<36x128xf32, #tpu.memory_space<vmem>>, vector<2x128xf32>
    %69 = arith.subf %63, %60 : vector<2x128xf32>
    %70 = arith.subf %64, %61 : vector<2x128xf32>
    %71 = arith.subf %65, %62 : vector<2x128xf32>
    %72 = arith.mulf %69, %69 : vector<2x128xf32>
    %73 = arith.mulf %70, %70 : vector<2x128xf32>
    %74 = arith.addf %72, %73 : vector<2x128xf32>
    %75 = arith.mulf %71, %71 : vector<2x128xf32>
    %76 = arith.addf %74, %75 : vector<2x128xf32>
    %cst_21 = arith.constant 1.000000e-24 : f32
    %77 = vector.broadcast %cst_21 : f32 to vector<2x128xf32>
    %78 = arith.maximumf %76, %77 : vector<2x128xf32>
    %79 = math.rsqrt %78 : vector<2x128xf32>
    %80 = arith.mulf %69, %79 : vector<2x128xf32>
    %81 = arith.mulf %70, %79 : vector<2x128xf32>
    %82 = arith.mulf %71, %79 : vector<2x128xf32>
    %83 = arith.mulf %80, %57 : vector<2x128xf32>
    %84 = arith.mulf %81, %58 : vector<2x128xf32>
    %85 = arith.addf %83, %84 : vector<2x128xf32>
    %86 = arith.mulf %82, %59 : vector<2x128xf32>
    %87 = arith.addf %85, %86 : vector<2x128xf32>
    %88 = math.absf %87 : vector<2x128xf32>
    %89 = arith.subf %66, %60 : vector<2x128xf32>
    %90 = arith.subf %67, %61 : vector<2x128xf32>
    %91 = arith.subf %68, %62 : vector<2x128xf32>
    %92 = arith.mulf %89, %89 : vector<2x128xf32>
    %93 = arith.mulf %90, %90 : vector<2x128xf32>
    %94 = arith.addf %92, %93 : vector<2x128xf32>
    %95 = arith.mulf %91, %91 : vector<2x128xf32>
    %96 = arith.addf %94, %95 : vector<2x128xf32>
    %cst_22 = arith.constant 1.000000e-24 : f32
    %97 = vector.broadcast %cst_22 : f32 to vector<2x128xf32>
    %98 = arith.maximumf %96, %97 : vector<2x128xf32>
    %99 = math.rsqrt %98 : vector<2x128xf32>
    %100 = arith.mulf %89, %99 : vector<2x128xf32>
    %101 = arith.mulf %90, %99 : vector<2x128xf32>
    %102 = arith.mulf %91, %99 : vector<2x128xf32>
    %103 = arith.mulf %100, %57 : vector<2x128xf32>
    %104 = arith.mulf %101, %58 : vector<2x128xf32>
    %105 = arith.addf %103, %104 : vector<2x128xf32>
    %106 = arith.mulf %102, %59 : vector<2x128xf32>
    %107 = arith.addf %105, %106 : vector<2x128xf32>
    %108 = math.absf %107 : vector<2x128xf32>
    %109 = arith.addf %88, %108 : vector<2x128xf32>
    %110 = arith.subf %66, %63 : vector<2x128xf32>
    %111 = arith.subf %67, %64 : vector<2x128xf32>
    %112 = arith.subf %68, %65 : vector<2x128xf32>
    %113 = arith.mulf %110, %110 : vector<2x128xf32>
    %114 = arith.mulf %111, %111 : vector<2x128xf32>
    %115 = arith.addf %113, %114 : vector<2x128xf32>
    %116 = arith.mulf %112, %112 : vector<2x128xf32>
    %117 = arith.addf %115, %116 : vector<2x128xf32>
    %cst_23 = arith.constant 1.000000e-24 : f32
    %118 = vector.broadcast %cst_23 : f32 to vector<2x128xf32>
    %119 = arith.maximumf %117, %118 : vector<2x128xf32>
    %120 = math.rsqrt %119 : vector<2x128xf32>
    %121 = arith.mulf %110, %120 : vector<2x128xf32>
    %122 = arith.mulf %111, %120 : vector<2x128xf32>
    %123 = arith.mulf %112, %120 : vector<2x128xf32>
    %124 = arith.mulf %121, %57 : vector<2x128xf32>
    %125 = arith.mulf %122, %58 : vector<2x128xf32>
    %126 = arith.addf %124, %125 : vector<2x128xf32>
    %127 = arith.mulf %123, %59 : vector<2x128xf32>
    %128 = arith.addf %126, %127 : vector<2x128xf32>
    %129 = math.absf %128 : vector<2x128xf32>
    %130 = arith.addf %109, %129 : vector<2x128xf32>
    %c0_24 = arith.constant 0 : index
    %c0_25 = arith.constant 0 : index
    %131 = vector.load %arg4[%c0_24, %c0_25] : memref<2x128xf32, #tpu.memory_space<vmem>>, vector<2x128xf32>
    %132 = arith.addf %131, %130 : vector<2x128xf32>
    %c0_26 = arith.constant 0 : index
    %c0_27 = arith.constant 0 : index
    %133 = vector.load %arg4[%c0_26, %c0_27] : memref<2x128xf32, #tpu.memory_space<vmem>>, vector<2x128xf32>
    tpu.vector_store %arg4[%c0_26, %c0_27], %132 {strides = array<i32>} : memref<2x128xf32, #tpu.memory_space<vmem>>, vector<2x128xf32>,
    %c0_i32_28 = arith.constant 0 : i32
    %134 = arith.cmpi eq, %arg1, %c0_i32_28 : i32
    %135 = arith.extui %134 : i1 to i32
    %c0_i32_29 = arith.constant 0 : i32
    %136 = arith.cmpi ne, %135, %c0_i32_29 : i32
    scf.if %136 {
      %c0_30 = arith.constant 0 : index
      %c0_31 = arith.constant 0 : index
      %137 = vector.load %arg4[%c0_30, %c0_31] : memref<2x128xf32, #tpu.memory_space<vmem>>, vector<2x128xf32>
      %138 = vector.shape_cast %137 : vector<2x128xf32> to vector<1x2x128xf32>
      %cst_32 = arith.constant dense<0.000000e+00> : vector<1xf32>
      %139 = vector.multi_reduction <add>, %138, %cst_32 [1, 2] : vector<1x2x128xf32> to vector<1xf32>
      %140 = vector.shape_cast %139 : vector<1xf32> to vector<1x1x1xf32>
      %141 = vector.extract %140[0, 0, 0] : f32 from vector<1x1x1xf32>
      %142 = vector.broadcast %141 : f32 to vector<8x128xf32>
      %c0_33 = arith.constant 0 : index
      %c0_34 = arith.constant 0 : index
      %143 = vector.load %arg3[%c0_33, %c0_34] : memref<8x128xf32, #tpu.memory_space<vmem>>, vector<8x128xf32>
      tpu.vector_store %arg3[%c0_33, %c0_34], %142 {strides = array<i32>} : memref<8x128xf32, #tpu.memory_space<vmem>>, vector<8x128xf32>,
    } else {
    }
    return
  }
  func.func @transform_0(%arg0: i32, %arg1: i32) -> (i32, i32) {
    %c1_i32 = arith.constant 1 : i32
    %0 = arith.muli %arg0, %c1_i32 : i32
    %1 = arith.addi %0, %arg1 : i32
    %c0_i32 = arith.constant 0 : i32
    %c0_i32_0 = arith.constant 0 : i32
    return %c0_i32, %1 : i32, i32
  }
  func.func @transform_1(%arg0: i32, %arg1: i32) -> (i32, i32) {
    %c0_i32 = arith.constant 0 : i32
    %c0_i32_0 = arith.constant 0 : i32
    return %arg0, %c0_i32 : i32, i32
  }
}

</mosaic_0001>

<llo_original>
// kernel: tpu_custom_call.1
$region0: #{tpu_custom_call.1}
  #allocation0 [shape = 'u32[]', space=smem, size = 0x4, offset = 0x4, fixed_abs, tag = 'smem constant byte address 0x4 - core index']
  #allocation1 [shape = 'u32[72,128]{1,0:T(1,128)}', space=vmem, size = 0x9000, scoped, tag = 'internal scratch']
  #allocation2 [shape = 'f32[2,128]{1,0:T(2,128)}', space=vmem, size = 0x400, scoped, tag = 'scratch operand']
  %s0 = inlined_call_operand.hbm [shape: f32[36,128], index: 0, kind: input, shape index: {}]
  %s1 = inlined_call_operand.hbm [shape: f32[8,128], index: 1, kind: output, shape index: {}]
  %s2 = sld [smem:[#allocation0]]
  $region26: #{tpu_custom_call.1} parent=0
    _
  %s4 = ssub.s32 1, %s2
  %s5 = scalar_select 0, %s4, %s2
  $region1: #{tpu_custom_call.1} parent=0
    #allocation3 [shape = 'u8[20480]{0}', space=vmem, size = 0x5000, scoped, tag = 'input window, operand 0, single buffered']
    #allocation4 [shape = 's32[1]{0}', space=sflag, size = 0x4, scoped, tag = 'scoped memory for tpu_custom_call.1']
    #allocation5 [shape = 's32[1]{0}', space=sflag, size = 0x4, scoped, tag = 'scoped memory for tpu_custom_call.1']
    #allocation6 [shape = 'u8[4096]{0}', space=vmem, size = 0x1000, scoped, tag = 'output window, operand 0, single buffered']
    %6 = vsyncpa [#allocation4], 0
    %7 = vsyncpa [#allocation5], 0
    // Predicated region
    $region2: #{tpu_custom_call.1} parent=1 // pred_check
      _
    $region3: #{tpu_custom_call.1} parent=1 // pred_check_branch
      %9 = sbr.rel (0) target = $region5
    $region4: #{tpu_custom_call.1} parent=1 // pred_region
      %s10 = sadd.s32 0, 0
      %12 = vsyncadd [#allocation4], 0
      %s13 = smul.addr %s10, 8
      %s14 = scalar_lea.hbm %s0, %s13
      %s15 = sshll.u32 %s14, 4
      %s16 = int_to_ptr.hbm [resolvable:$true] %s15
      %s17 = sshll.u32 [#allocation3], 4
      %s18 = int_to_ptr.vmem [resolvable:$true] %s17
      %23 = dma.hbm_to_vmem [thread:$0]  %s16, 640, %s18, [#allocation4], 128, 128, 8
    $region5: #{tpu_custom_call.1} parent=1 // pred_fallthru
      _
    // Predicated region
    $region6: #{tpu_custom_call.1} parent=1 // pred_check
      _
    $region7: #{tpu_custom_call.1} parent=1 // pred_check_branch
      %25 = sbr.rel (0) target = $region9
    $region8: #{tpu_custom_call.1} parent=1 // pred_region
      %27 = dma.done [#allocation4], 640
    $region9: #{tpu_custom_call.1} parent=1 // pred_fallthru
      _
    %s28 = sadd.s32 0, 0
    %p29 = scmp.eq.s32.totalorder 0, 0
    // Predicated region
    $region10: #{tpu_custom_call.1} parent=1 // pred_check
      %p30 = pneg %p29
    $region11: #{tpu_custom_call.1} parent=1 // pred_check_branch
      %32 = sbr.rel (%p30) target = $region13
    $region12: #{tpu_custom_call.1} parent=1 // pred_region
      %33 = vst [vmem:[#allocation2] sm:$0x3] 0.0
    $region13: #{tpu_custom_call.1} parent=1 // pred_fallthru
      _
    %v34 = vld [vmem:[#allocation3 + $0x12] sm:$0x3]
    %v35 = vld [vmem:[#allocation3 + $0x14] sm:$0x3]
    %v36 = vld [vmem:[#allocation3 + $0x16] sm:$0x3]
    %v37 = vld [vmem:[#allocation3 + $0x18] sm:$0x3]
    %v38 = vld [vmem:[#allocation3 + $0x1a] sm:$0x3]
    %v39 = vld [vmem:[#allocation3 + $0x1c] sm:$0x3]
    %v40 = vld [vmem:[#allocation3 + $0x1e] sm:$0x3]
    %v41 = vld [vmem:[#allocation3 + $0x20] sm:$0x3]
    %v42 = vld [vmem:[#allocation3 + $0x22] sm:$0x3]
    %v43 = vsub.f32 %v37, %v34
    %v44 = vsub.f32 %v38, %v35
    %v45 = vsub.f32 %v39, %v36
    %v46 = vmul.f32 %v43, %v43
    %v47 = vmul.f32 %v44, %v44
    %v48 = vadd.f32 %v46, %v47
    %v49 = vmul.f32 %v45, %v45
    %v50 = vadd.f32 %v48, %v49
    %v51 = vmax.f32 %v50, 1e-24
    %v52 = vrsqrt.pop %v51
    %v53 = vmul.f32 %v52, %v51
    %v54 = vmul.f32 %v53, %v52
    %v55 = vmul.f32 0.5, %v54
    %v56 = vsub.f32 1.5, %v55
    %v57 = vmul.f32 %v52, %v56
    %vm58 = vweird.f32 %v51
    %vm59 = vweird.f32 %v52
    %vm60 = vmor %vm58, %vm59
    %v61 = vsel %vm60, %v52, %v57
    %v62 = vmul.f32 %v43, %v61
    %v63 = vmul.f32 %v44, %v61
    %v64 = vmul.f32 %v45, %v61
    %v65 = vsub.f32 %v40, %v34
    %v66 = vsub.f32 %v41, %v35
    %v67 = vsub.f32 %v42, %v36
    %v68 = vmul.f32 %v65, %v65
    %v69 = vmul.f32 %v66, %v66
    %v70 = vadd.f32 %v68, %v69
    %v71 = vmul.f32 %v67, %v67
    %v72 = vadd.f32 %v70, %v71
    %v73 = vmax.f32 %v72, 1e-24
    %v74 = vrsqrt.pop %v73
    %v75 = vmul.f32 %v74, %v73
    %v76 = vmul.f32 %v75, %v74
    %v77 = vmul.f32 0.5, %v76
    %v78 = vsub.f32 1.5, %v77
    %v79 = vmul.f32 %v74, %v78
    %vm80 = vweird.f32 %v73
    %vm81 = vweird.f32 %v74
    %vm82 = vmor %vm80, %vm81
    %v83 = vsel %vm82, %v74, %v79
    %v84 = vmul.f32 %v65, %v83
    %v85 = vmul.f32 %v66, %v83
    %v86 = vmul.f32 %v67, %v83
    %v87 = vmul.f32 %v63, %v86
    %v88 = vmul.f32 %v64, %v85
    %v89 = vsub.f32 %v87, %v88
    %v90 = vmul.f32 %v64, %v84
    %v91 = vmul.f32 %v62, %v86
    %v92 = vsub.f32 %v90, %v91
    %v93 = vmul.f32 %v62, %v85
    %v94 = vmul.f32 %v63, %v84
    %v95 = vsub.f32 %v93, %v94
    %v96 = vmul.f32 %v89, %v89
    %v97 = vmul.f32 %v92, %v92
    %v98 = vadd.f32 %v96, %v97
    %v99 = vmul.f32 %v95, %v95
    %v100 = vadd.f32 %v98, %v99
    %v101 = vmax.f32 %v100, 1e-24
    %v102 = vrsqrt.pop %v101
    %v103 = vmul.f32 %v102, %v101
    %v104 = vmul.f32 %v103, %v102
    %v105 = vmul.f32 0.5, %v104
    %v106 = vsub.f32 1.5, %v105
    %v107 = vmul.f32 %v102, %v106
    %vm108 = vweird.f32 %v101
    %vm109 = vweird.f32 %v102
    %vm110 = vmor %vm108, %vm109
    %v111 = vsel %vm110, %v102, %v107
    %v112 = vmul.f32 %v89, %v111
    %v113 = vmul.f32 %v92, %v111
    %v114 = vmul.f32 %v95, %v111
    %v115 = vld [vmem:[#allocation3] sm:$0x3]
    %v116 = vld [vmem:[#allocation3 + $0x2] sm:$0x3]
    %v117 = vld [vmem:[#allocation3 + $0x4] sm:$0x3]
    %v118 = vld [vmem:[#allocation3 + $0x6] sm:$0x3]
    %v119 = vld [vmem:[#allocation3 + $0x8] sm:$0x3]
    %v120 = vld [vmem:[#allocation3 + $0xa] sm:$0x3]
    %v121 = vld [vmem:[#allocation3 + $0xc] sm:$0x3]
    %v122 = vld [vmem:[#allocation3 + $0xe] sm:$0x3]
    %v123 = vld [vmem:[#allocation3 + $0x10] sm:$0x3]
    %v124 = vsub.f32 %v118, %v115
    %v125 = vsub.f32 %v119, %v116
    %v126 = vsub.f32 %v120, %v117
    %v127 = vmul.f32 %v124, %v124
    %v128 = vmul.f32 %v125, %v125
    %v129 = vadd.f32 %v127, %v128
    %v130 = vmul.f32 %v126, %v126
    %v131 = vadd.f32 %v129, %v130
    %v132 = vmax.f32 %v131, 1e-24
    %v133 = vrsqrt.pop %v132
    %v134 = vmul.f32 %v133, %v132
    %v135 = vmul.f32 %v134, %v133
    %v136 = vmul.f32 0.5, %v135
    %v137 = vsub.f32 1.5, %v136
    %v138 = vmul.f32 %v133, %v137
    %vm139 = vweird.f32 %v132
    %vm140 = vweird.f32 %v133
    %vm141 = vmor %vm139, %vm140
    %v142 = vsel %vm141, %v133, %v138
    %v143 = vmul.f32 %v124, %v142
    %v144 = vmul.f32 %v125, %v142
    %v145 = vmul.f32 %v126, %v142
    %v146 = vmul.f32 %v143, %v112
    %v147 = vmul.f32 %v144, %v113
    %v148 = vadd.f32 %v146, %v147
    %v149 = vmul.f32 %v145, %v114
    %v150 = vadd.f32 %v148, %v149
    %v151 = vand.u32 2147483647, %v150
    %v152 = vsub.f32 %v121, %v115
    %v153 = vsub.f32 %v122, %v116
    %v154 = vsub.f32 %v123, %v117
    %v155 = vmul.f32 %v152, %v152
    %v156 = vmul.f32 %v153, %v153
    %v157 = vadd.f32 %v155, %v156
    %v158 = vmul.f32 %v154, %v154
    %v159 = vadd.f32 %v157, %v158
    %v160 = vmax.f32 %v159, 1e-24
    %v161 = vrsqrt.pop %v160
    %v162 = vmul.f32 %v161, %v160
    %v163 = vmul.f32 %v162, %v161
    %v164 = vmul.f32 0.5, %v163
    %v165 = vsub.f32 1.5, %v164
    %v166 = vmul.f32 %v161, %v165
    %vm167 = vweird.f32 %v160
    %vm168 = vweird.f32 %v161
    %vm169 = vmor %vm167, %vm168
    %v170 = vsel %vm169, %v161, %v166
    %v171 = vmul.f32 %v152, %v170
    %v172 = vmul.f32 %v153, %v170
    %v173 = vmul.f32 %v154, %v170
    %v174 = vmul.f32 %v171, %v112
    %v175 = vmul.f32 %v172, %v113
    %v176 = vadd.f32 %v174, %v175
    %v177 = vmul.f32 %v173, %v114
    %v178 = vadd.f32 %v176, %v177
    %v179 = vand.u32 2147483647, %v178
    %v180 = vadd.f32 %v151, %v179
    %v181 = vsub.f32 %v121, %v118
    %v182 = vsub.f32 %v122, %v119
    %v183 = vsub.f32 %v123, %v120
    %v184 = vmul.f32 %v181, %v181
    %v185 = vmul.f32 %v182, %v182
    %v186 = vadd.f32 %v184, %v185
    %v187 = vmul.f32 %v183, %v183
    %v188 = vadd.f32 %v186, %v187
    %v189 = vmax.f32 %v188, 1e-24
    %v190 = vrsqrt.pop %v189
    %v191 = vmul.f32 %v190, %v189
    %v192 = vmul.f32 %v191, %v190
    %v193 = vmul.f32 0.5, %v192
    %v194 = vsub.f32 1.5, %v193
    %v195 = vmul.f32 %v190, %v194
    %vm196 = vweird.f32 %v189
    %vm197 = vweird.f32 %v190
    %vm198 = vmor %vm196, %vm197
    %v199 = vsel %vm198, %v190, %v195
    %v200 = vmul.f32 %v181, %v199
    %v201 = vmul.f32 %v182, %v199
    %v202 = vmul.f32 %v183, %v199
    %v203 = vmul.f32 %v200, %v112
    %v204 = vmul.f32 %v201, %v113
    %v205 = vadd.f32 %v203, %v204
    %v206 = vmul.f32 %v202, %v114
    %v207 = vadd.f32 %v205, %v206
    %v208 = vand.u32 2147483647, %v207
    %v209 = vadd.f32 %v180, %v208
    %v210 = vld [vmem:[#allocation2] sm:$0x3]
    %v211 = vadd.f32 %v210, %v209
    %212 = vst [vmem:[#allocation2] sm:$0x3] %v211
    // Predicated region
    $region14: #{tpu_custom_call.1} parent=1 // pred_check
      %p213 = pneg %p29
    $region15: #{tpu_custom_call.1} parent=1 // pred_check_branch
      %215 = sbr.rel (%p213) target = $region17
    $region16: #{tpu_custom_call.1} parent=1 // pred_region
      %v216 = vld [vmem:[#allocation2] sm:$0x3]
      %vm217 = vcmask 1041408
      %v218 = vsel %vm217, %v216, 0.0
      %219 = vadd.xlane.f32.xlu0 %v218
      %v220 = vpop.xlane.xlu0 %219
      %v221 = vrot.slane %v220, 4
      %v222 = vadd.f32 %v220, %v221
      %v223 = vrot.slane %v222, 2
      %v224 = vadd.f32 %v222, %v223
      %v225 = vrot.slane %v224, 1
      %v226 = vadd.f32 %v224, %v225
      %s227 = vtos %v226
      %v228 = vstv %s227
      %229 = vst [vmem:[#allocation6] sm:$0xff] %v228
    $region17: #{tpu_custom_call.1} parent=1 // pred_fallthru
      _
    // Predicated region
    $region18: #{tpu_custom_call.1} parent=1 // pred_check
      _
    $region19: #{tpu_custom_call.1} parent=1 // pred_check_branch
      %231 = sbr.rel (0) target = $region21
    $region20: #{tpu_custom_call.1} parent=1 // pred_region
      %233 = vsyncadd [#allocation5], 0
      %s235 = sshll.u32 [#allocation6], 4
      %s236 = int_to_ptr.vmem [resolvable:$true] %s235
      %s237 = sshll.u32 %s1, 4
      %s238 = int_to_ptr.hbm [resolvable:$true] %s237
      %240 = dma.vmem_to_hbm [thread:$0]  %s236, 128, %s238, [#allocation5]
    $region21: #{tpu_custom_call.1} parent=1 // pred_fallthru
      _
    // Predicated region
    $region22: #{tpu_custom_call.1} parent=1 // pred_check
      _
    $region23: #{tpu_custom_call.1} parent=1 // pred_check_branch
      %242 = sbr.rel (0) target = $region25
    $region24: #{tpu_custom_call.1} parent=1 // pred_region
      %244 = dma.done [#allocation5], 128
    $region25: #{tpu_custom_call.1} parent=1 // pred_fallthru
      _
    %245 = vsyncpa [#allocation4], 1
    %246 = vsyncpa [#allocation5], 1

</llo_original>
